<compile_context>
chip_gen: v5e
topology: v5e:2x2
jax: 0.10.0
libtpu: 0.0.40
codegen_flags: <defaults>
</compile_context>

<pallas_src>
import jax
import jax.numpy as jnp
from jax.experimental import pallas as pl
from jax.experimental.pallas import tpu as pltpu


def _pick_h_tile(hidden_size: int, k_dim: int, itemsize: int) -> int:
    """Largest lane-aligned gate-tile width that divides H and keeps the
    double-buffered weight tile (2 * K * 4*Ht * itemsize) within ~24 MiB."""
    candidates = [c for c in (1024, 512, 256, 128) if hidden_size % c == 0]
    if not candidates:
        return hidden_size  # tiny / unaligned H: single full-width tile
    budget = 24 * 1024 * 1024
    for c in candidates:
        if 2 * k_dim * 4 * c * itemsize <= budget:
            return c
    return candidates[-1]  # smallest aligned tile; accept the larger footprint


def _pick_b_tile(batch: int) -> int:
    """Batch tile: full batch when small; otherwise a sublane-aligned divisor."""
    if batch <= 512:
        return batch
    for c in (512, 256, 128, 64, 32, 16, 8):
        if batch % c == 0:
            return c
    return batch  # unaligned batch: single full-height tile


def _lstm_cell_kernel(xh_ref, w_ref, b_ref, c_ref, h_new_ref, c_new_ref):
    """One grid step = one (H-slice, batch-slice) of the LSTM cell.

    xh_ref : (Bt, K)      bf16/f32   fused [x | h_prev] batch tile
    w_ref  : (K, 4*Ht)    bf16/f32   gate-interleaved weight tile (streamed)
    b_ref  : (1, 4*Ht)    f32        fused bias tile
    c_ref  : (Bt, Ht)     f32        c_prev slice
    """
    # Single fused GEMM on the MXU; f32 accumulation.
    gates = jnp.dot(xh_ref[...], w_ref[...],
                    preferred_element_type=jnp.float32) + b_ref[...]

    ht = h_new_ref.shape[1]
    # Columns inside this tile are ordered [i | f | c | o] for this H-slice.
    i_gate = jax.nn.sigmoid(gates[:, 0 * ht:1 * ht])
    f_gate = jax.nn.sigmoid(gates[:, 1 * ht:2 * ht])
    c_gate = jnp.tanh(gates[:, 2 * ht:3 * ht])
    o_gate = jax.nn.sigmoid(gates[:, 3 * ht:4 * ht])

    c_prev = c_ref[...].astype(jnp.float32)
    c_new = f_gate * c_prev + i_gate * c_gate
    h_new = o_gate * jnp.tanh(c_new)

    c_new_ref[...] = c_new.astype(c_new_ref.dtype)
    h_new_ref[...] = h_new.astype(h_new_ref.dtype)


def pack_lstm_params(w_i2h, b_i2h, w_h2h, b_h2h, compute_dtype=jnp.bfloat16):
    """One-time parameter prep (hoisted out of the per-step hot path).

    Args (PyTorch nn.Linear layouts):
      w_i2h: (4H, input_size), b_i2h: (4H,)
      w_h2h: (4H, hidden_size), b_h2h: (4H,)
    Returns:
      w_packed: (input_size + H, 4H) in `compute_dtype`, columns reordered so
                each 4*Ht tile holds the [i|f|c|o] columns of one H-slice.
      b_packed: (1, 4H) float32, same column order, biases pre-summed.
    """
    hidden = w_h2h.shape[1]
    k_dim = w_i2h.shape[1] + hidden
    itemsize = jnp.dtype(compute_dtype).itemsize
    ht = _pick_h_tile(hidden, k_dim, itemsize)
    n_tiles = hidden // ht

    # Stack & transpose once: (K, 4H) so the kernel does a plain (B,K)@(K,4H).
    w = jnp.concatenate([w_i2h, w_h2h], axis=1).T          # (in + H, 4H)
    b = b_i2h + b_h2h                                      # (4H,)

    # Gate-interleave-per-tile column permutation:
    # new column [tile j, gate g, offset r]  <-  old column g*H + j*Ht + r
    perm = (jnp.arange(4 * hidden)
            .reshape(4, n_tiles, ht)
            .transpose(1, 0, 2)
            .reshape(-1))
    w_packed = w[:, perm].astype(compute_dtype)
    b_packed = b[perm].reshape(1, 4 * hidden).astype(jnp.float32)
    return w_packed, b_packed


@jax.jit
def lstm_cell_forward(x, h_prev, c_prev, w_packed, b_packed):
    """Pallas LSTMCell forward (hot path).

    x:        (B, input_size) f32
    h_prev:   (B, H) f32
    c_prev:   (B, H) f32
    w_packed: (input_size + H, 4H)  -- from pack_lstm_params
    b_packed: (1, 4H) f32           -- from pack_lstm_params
    Returns (h_new, c_new), each (B, H) in x.dtype.
    """
    batch = x.shape[0]
    hidden = h_prev.shape[1]
    k_dim = w_packed.shape[0]
    itemsize = jnp.dtype(w_packed.dtype).itemsize

    ht = _pick_h_tile(hidden, k_dim, itemsize)
    n_tiles = hidden // ht
    bt = _pick_b_tile(batch)
    n_btiles = batch // bt

    # Fused activation operand; cast once to the MXU compute dtype.
    xh = jnp.concatenate([x, h_prev], axis=1).astype(w_packed.dtype)  # (B, K)

    cost = pl.CostEstimate(
        flops=2 * batch * k_dim * 4 * hidden,
        transcendentals=5 * batch * hidden,
        bytes_accessed=(xh.size * itemsize
                        + w_packed.size * itemsize
                        + b_packed.size * 4
                        + 3 * batch * hidden * 4),
    )

    h_new, c_new = pl.pallas_call(
        _lstm_cell_kernel,
        out_shape=(
            jax.ShapeDtypeStruct((batch, hidden), x.dtype),
            jax.ShapeDtypeStruct((batch, hidden), x.dtype),
        ),
        # Batch axis innermost: the weight tile (index_map ignores `b`) stays
        # VMEM-resident while batch sub-tiles stream past it.
        grid=(n_tiles, n_btiles),
        in_specs=[
            pl.BlockSpec((bt, k_dim), lambda j, b: (b, 0)),
            pl.BlockSpec((k_dim, 4 * ht), lambda j, b: (0, j)),
            pl.BlockSpec((1, 4 * ht), lambda j, b: (0, j)),
            pl.BlockSpec((bt, ht), lambda j, b: (b, j)),
        ],
        out_specs=(
            pl.BlockSpec((bt, ht), lambda j, b: (b, j)),
            pl.BlockSpec((bt, ht), lambda j, b: (b, j)),
        ),
        compiler_params=pltpu.CompilerParams(
            # All (H-tile, batch-tile) pairs are independent -> megacore-able.
            dimension_semantics=("parallel", "parallel"),
            # Fits default/physical VMEM on v5e/v6e/v7x with headroom.
            vmem_limit_bytes=48 * 1024 * 1024,
        ),
        cost_estimate=cost,
    )(xh, w_packed, b_packed, c_prev)
    return h_new, c_new


def _reference_forward(x, h_prev, c_prev, w_i2h, b_i2h, w_h2h, b_h2h):
    """Pure-JAX f32 reference mirroring the PyTorch module exactly."""
    hidden = h_prev.shape[1]
    combined = x @ w_i2h.T + b_i2h + h_prev @ w_h2h.T + b_h2h
    i_gate = jax.nn.sigmoid(combined[:, 0 * hidden:1 * hidden])
    f_gate = jax.nn.sigmoid(combined[:, 1 * hidden:2 * hidden])
    c_gate = jnp.tanh(combined[:, 2 * hidden:3 * hidden])
    o_gate = jax.nn.sigmoid(combined[:, 3 * hidden:4 * hidden])
    c_new = f_gate * c_prev + i_gate * c_gate
    h_new = o_gate * jnp.tanh(c_new)
    return h_new, c_new


# TODO(synk): the module's custom backward() is not translated (forward-only
# kernel); a sequence-level kernel with a time grid axis and VMEM-resident
# weights is the natural next step for full-RNN use.


if __name__ == "__main__":
    batch = 2
    input_size = 16
    hidden_size = 32

    key = jax.random.PRNGKey(0)
    k_x, k_h, k_c, k_wi, k_bi, k_wh, k_bh = jax.random.split(key, 7)

    x = jax.random.normal(k_x, (batch, input_size), dtype=jnp.float32)
    h_prev = jax.random.normal(k_h, (batch, hidden_size), dtype=jnp.float32)
    c_prev = jax.random.normal(k_c, (batch, hidden_size), dtype=jnp.float32)

    bound_i = 1.0 / (input_size ** 0.5)
    bound_h = 1.0 / (hidden_size ** 0.5)
    w_i2h = jax.random.uniform(k_wi, (4 * hidden_size, input_size),
                               minval=-bound_i, maxval=bound_i, dtype=jnp.float32)
    b_i2h = jax.random.uniform(k_bi, (4 * hidden_size,),
                               minval=-bound_i, maxval=bound_i, dtype=jnp.float32)
    w_h2h = jax.random.uniform(k_wh, (4 * hidden_size, hidden_size),
                               minval=-bound_h, maxval=bound_h, dtype=jnp.float32)
    b_h2h = jax.random.uniform(k_bh, (4 * hidden_size,),
                               minval=-bound_h, maxval=bound_h, dtype=jnp.float32)

    h_ref, c_ref = _reference_forward(x, h_prev, c_prev,
                                      w_i2h, b_i2h, w_h2h, b_h2h)

    # --- f32 compute path: tight check against the reference. ---
    w_f32, b_f32 = pack_lstm_params(w_i2h, b_i2h, w_h2h, b_h2h,
                                    compute_dtype=jnp.float32)
    h_f32, c_f32 = lstm_cell_forward(x, h_prev, c_prev, w_f32, b_f32)
    jax.block_until_ready((h_f32, c_f32))
    assert jnp.allclose(h_f32, h_ref, atol=1e-5, rtol=1e-5)
    assert jnp.allclose(c_f32, c_ref, atol=1e-5, rtol=1e-5)

    # --- bf16 compute path (production config): looser tolerance. ---
    w_bf16, b_bf16 = pack_lstm_params(w_i2h, b_i2h, w_h2h, b_h2h,
                                      compute_dtype=jnp.bfloat16)
    h_bf, c_bf = lstm_cell_forward(x, h_prev, c_prev, w_bf16, b_bf16)
    jax.block_until_ready((h_bf, c_bf))
    assert jnp.allclose(h_bf, h_ref, atol=5e-2, rtol=5e-2)
    assert jnp.allclose(c_bf, c_ref, atol=5e-2, rtol=5e-2)

    print("KERNEL_OK")
</pallas_src>

<mosaic_0001>
module attributes {stable_mosaic.version = 11 : i64} {
  func.func @_lstm_cell_kernel(%arg0: i32, %arg1: i32, %arg2: memref<2x48xf32, #tpu.memory_space<vmem>>, %arg3: memref<48x128xf32, #tpu.memory_space<vmem>>, %arg4: memref<1x128xf32, #tpu.memory_space<vmem>>, %arg5: memref<2x32xf32, #tpu.memory_space<vmem>>, %arg6: memref<2x32xf32, #tpu.memory_space<vmem>>, %arg7: memref<2x32xf32, #tpu.memory_space<vmem>>) attributes {dimension_semantics = [#tpu.dimension_semantics<parallel>, #tpu.dimension_semantics<parallel>], iteration_bounds = array<i64: 1, 1>, scalar_prefetch = 0 : i64, scratch_operands = 0 : i64, tpu.core_type = #tpu.core_type<tc>, window_params = [{transform_indices = @transform_0, window_bounds = array<i64: 2, 48>}, {transform_indices = @transform_1, window_bounds = array<i64: 48, 128>}, {transform_indices = @transform_2, window_bounds = array<i64: 1, 128>}, {transform_indices = @transform_3, window_bounds = array<i64: 2, 32>}, {transform_indices = @transform_4, window_bounds = array<i64: 2, 32>}, {transform_indices = @transform_5, window_bounds = array<i64: 2, 32>}]} {
    %c0 = arith.constant 0 : index
    %c0_0 = arith.constant 0 : index
    %0 = vector.load %arg2[%c0, %c0_0] : memref<2x48xf32, #tpu.memory_space<vmem>>, vector<2x48xf32>
    %c0_1 = arith.constant 0 : index
    %c0_2 = arith.constant 0 : index
    %1 = vector.load %arg3[%c0_1, %c0_2] : memref<48x128xf32, #tpu.memory_space<vmem>>, vector<48x128xf32>
    %cst = arith.constant dense<0.000000e+00> : vector<2x128xf32>
    %2 = tpu.matmul %0, %1, %cst {dimension_numbers = #tpu.dot_dimension_numbers<[1], [0], [0], [1], [0, 0, 1, 1], [], []>} : vector<2x48xf32>, vector<48x128xf32>, vector<2x128xf32> -> vector<2x128xf32>
    %c0_3 = arith.constant 0 : index
    %c0_4 = arith.constant 0 : index
    %3 = vector.load %arg4[%c0_3, %c0_4] : memref<1x128xf32, #tpu.memory_space<vmem>>, vector<1x128xf32>
    %4 = vector.broadcast %3 : vector<1x128xf32> to vector<2x128xf32>
    %5 = arith.addf %2, %4 : vector<2x128xf32>
    %6 = vector.extract_strided_slice %5 {offsets = [0, 0], sizes = [2, 32], strides = [1, 1]} : vector<2x128xf32> to vector<2x32xf32>
    %7 = arith.negf %6 : vector<2x32xf32>
    %8 = math.exp %7 : vector<2x32xf32>
    %cst_5 = arith.constant 1.000000e+00 : f32
    %9 = vector.broadcast %cst_5 : f32 to vector<2x32xf32>
    %10 = arith.addf %9, %8 : vector<2x32xf32>
    %11 = arith.divf %9, %10 : vector<2x32xf32>
    %12 = vector.extract_strided_slice %5 {offsets = [0, 32], sizes = [2, 32], strides = [1, 1]} : vector<2x128xf32> to vector<2x32xf32>
    %13 = arith.negf %12 : vector<2x32xf32>
    %14 = math.exp %13 : vector<2x32xf32>
    %cst_6 = arith.constant 1.000000e+00 : f32
    %15 = vector.broadcast %cst_6 : f32 to vector<2x32xf32>
    %16 = arith.addf %15, %14 : vector<2x32xf32>
    %17 = arith.divf %15, %16 : vector<2x32xf32>
    %18 = vector.extract_strided_slice %5 {offsets = [0, 64], sizes = [2, 32], strides = [1, 1]} : vector<2x128xf32> to vector<2x32xf32>
    %19 = math.tanh %18 : vector<2x32xf32>
    %20 = vector.extract_strided_slice %5 {offsets = [0, 96], sizes = [2, 32], strides = [1, 1]} : vector<2x128xf32> to vector<2x32xf32>
    %21 = arith.negf %20 : vector<2x32xf32>
    %22 = math.exp %21 : vector<2x32xf32>
    %cst_7 = arith.constant 1.000000e+00 : f32
    %23 = vector.broadcast %cst_7 : f32 to vector<2x32xf32>
    %24 = arith.addf %23, %22 : vector<2x32xf32>
    %25 = arith.divf %23, %24 : vector<2x32xf32>
    %c0_8 = arith.constant 0 : index
    %c0_9 = arith.constant 0 : index
    %26 = vector.load %arg5[%c0_8, %c0_9] : memref<2x32xf32, #tpu.memory_space<vmem>>, vector<2x32xf32>
    %27 = arith.mulf %17, %26 : vector<2x32xf32>
    %28 = arith.mulf %11, %19 : vector<2x32xf32>
    %29 = arith.addf %27, %28 : vector<2x32xf32>
    %30 = math.tanh %29 : vector<2x32xf32>
    %31 = arith.mulf %25, %30 : vector<2x32xf32>
    %c0_10 = arith.constant 0 : index
    %c0_11 = arith.constant 0 : index
    %32 = vector.load %arg7[%c0_10, %c0_11] : memref<2x32xf32, #tpu.memory_space<vmem>>, vector<2x32xf32>
    tpu.vector_store %arg7[%c0_10, %c0_11], %29 {strides = array<i32>} : memref<2x32xf32, #tpu.memory_space<vmem>>, vector<2x32xf32>,
    %c0_12 = arith.constant 0 : index
    %c0_13 = arith.constant 0 : index
    %33 = vector.load %arg6[%c0_12, %c0_13] : memref<2x32xf32, #tpu.memory_space<vmem>>, vector<2x32xf32>
    tpu.vector_store %arg6[%c0_12, %c0_13], %31 {strides = array<i32>} : memref<2x32xf32, #tpu.memory_space<vmem>>, vector<2x32xf32>,
    return
  }
  func.func @transform_0(%arg0: i32, %arg1: i32) -> (i32, i32) {
    %c0_i32 = arith.constant 0 : i32
    %c0_i32_0 = arith.constant 0 : i32
    return %arg1, %c0_i32 : i32, i32
  }
  func.func @transform_1(%arg0: i32, %arg1: i32) -> (i32, i32) {
    %c0_i32 = arith.constant 0 : i32
    %c0_i32_0 = arith.constant 0 : i32
    return %c0_i32, %arg0 : i32, i32
  }
  func.func @transform_2(%arg0: i32, %arg1: i32) -> (i32, i32) {
    %c0_i32 = arith.constant 0 : i32
    %c0_i32_0 = arith.constant 0 : i32
    return %c0_i32, %arg0 : i32, i32
  }
  func.func @transform_3(%arg0: i32, %arg1: i32) -> (i32, i32) {
    %c0_i32 = arith.constant 0 : i32
    return %arg1, %arg0 : i32, i32
  }
  func.func @transform_4(%arg0: i32, %arg1: i32) -> (i32, i32) {
    %c0_i32 = arith.constant 0 : i32
    return %arg1, %arg0 : i32, i32
  }
  func.func @transform_5(%arg0: i32, %arg1: i32) -> (i32, i32) {
    %c0_i32 = arith.constant 0 : i32
    return %arg1, %arg0 : i32, i32
  }
}

</mosaic_0001>

<llo_original>
// kernel: lstm_cell_forward.1
$region0: #{lstm_cell_forward.1}
  #allocation0 [shape = 'u32[]', space=smem, size = 0x4, offset = 0x4, fixed_abs, tag = 'smem constant byte address 0x4 - core index']
  #allocation1 [shape = 'u32[72,128]{1,0:T(1,128)}', space=vmem, size = 0x9000, scoped, tag = 'internal scratch']
  %s0 = inlined_call_operand.vmem [shape: f32[2,48], index: 0, kind: input, shape index: {}]
  %s1 = inlined_call_operand.hbm [shape: f32[48,128], index: 1, kind: input, shape index: {}]
  %s2 = inlined_call_operand.vmem [shape: f32[1,128], index: 2, kind: input, shape index: {}]
  %s3 = inlined_call_operand.vmem [shape: f32[2,32], index: 3, kind: input, shape index: {}]
  %s4 = inlined_call_operand.hbm [shape: f32[2,32], index: 4, kind: output, shape index: {0}]
  %s5 = inlined_call_operand.hbm [shape: f32[2,32], index: 5, kind: output, shape index: {1}]
  %6 = xla_tuple %s4, %s5
  %s7 = sld [smem:[#allocation0]]
  $region38: #{lstm_cell_forward.1} parent=0
    _
  %s9 = ssub.s32 1, %s7
  %s10 = scalar_select 0, %s9, %s7
  $region1: #{lstm_cell_forward.1} parent=0
    #allocation2 [shape = 'u8[24576]{0}', space=vmem, size = 0x6000, scoped, tag = 'input window, operand 1, single buffered']
    #allocation3 [shape = 's32[1]{0}', space=sflag, size = 0x4, scoped, tag = 'scoped memory for lstm_cell_forward.1']
    #allocation4 [shape = 's32[1]{0}', space=sflag, size = 0x4, scoped, tag = 'scoped memory for lstm_cell_forward.1']
    #allocation5 [shape = 'u8[1024]{0}', space=vmem, size = 0x400, scoped, tag = 'output window, operand 0, single buffered']
    #allocation6 [shape = 'u8[1024]{0}', space=vmem, size = 0x400, scoped, tag = 'output window, operand 1, single buffered']
    #allocation7 [shape = 's32[1]{0}', space=sflag, size = 0x4, scoped, tag = 'scoped memory for lstm_cell_forward.1']
    %11 = vsyncpa [#allocation3], 0
    %12 = vsyncpa [#allocation4], 0
    %13 = vsyncpa [#allocation7], 0
    // Predicated region
    $region2: #{lstm_cell_forward.1} parent=1 // pred_check
      _
    $region3: #{lstm_cell_forward.1} parent=1 // pred_check_branch
      %15 = sbr.rel (0) target = $region5
    $region4: #{lstm_cell_forward.1} parent=1 // pred_region
      _
    $region5: #{lstm_cell_forward.1} parent=1 // pred_fallthru
      _
    // Predicated region
    $region6: #{lstm_cell_forward.1} parent=1 // pred_check
      _
    $region7: #{lstm_cell_forward.1} parent=1 // pred_check_branch
      %17 = sbr.rel (0) target = $region9
    $region8: #{lstm_cell_forward.1} parent=1 // pred_region
      %19 = vsyncadd [#allocation3], 0
      %s20 = sshll.u32 %s1, 4
      %s21 = int_to_ptr.hbm [resolvable:$true] %s20
      %s22 = sshll.u32 [#allocation2], 4
      %s23 = int_to_ptr.vmem [resolvable:$true] %s22
      %28 = dma.hbm_to_vmem [thread:$0]  %s21, 768, %s23, [#allocation3], 128, 128, 8
    $region9: #{lstm_cell_forward.1} parent=1 // pred_fallthru
      _
    // Predicated region
    $region10: #{lstm_cell_forward.1} parent=1 // pred_check
      _
    $region11: #{lstm_cell_forward.1} parent=1 // pred_check_branch
      %30 = sbr.rel (0) target = $region13
    $region12: #{lstm_cell_forward.1} parent=1 // pred_region
      _
    $region13: #{lstm_cell_forward.1} parent=1 // pred_fallthru
      _
    // Predicated region
    $region14: #{lstm_cell_forward.1} parent=1 // pred_check
      _
    $region15: #{lstm_cell_forward.1} parent=1 // pred_check_branch
      %32 = sbr.rel (0) target = $region17
    $region16: #{lstm_cell_forward.1} parent=1 // pred_region
      _
    $region17: #{lstm_cell_forward.1} parent=1 // pred_fallthru
      _
    // Predicated region
    $region18: #{lstm_cell_forward.1} parent=1 // pred_check
      _
    $region19: #{lstm_cell_forward.1} parent=1 // pred_check_branch
      %34 = sbr.rel (0) target = $region21
    $region20: #{lstm_cell_forward.1} parent=1 // pred_region
      %36 = dma.done [#allocation3], 768
    $region21: #{lstm_cell_forward.1} parent=1 // pred_fallthru
      _
    %v37 = vld [vmem:[%s0] sm:$0x3]
    %v38 = vld [vmem:[#allocation2] sm:$0xff]
    %v39 = vld [vmem:[#allocation2 + $0x8] sm:$0xff]
    %v40 = vld [vmem:[#allocation2 + $0x10] sm:$0xff]
    %v41 = vld [vmem:[#allocation2 + $0x18] sm:$0xff]
    %v42 = vld [vmem:[#allocation2 + $0x20] sm:$0xff]
    %v43 = vld [vmem:[#allocation2 + $0x28] sm:$0xff]
    %v44 = vld [vmem:[%s2] sm:$0x1]
    %v46 = vperm.slane %v44, 0
    %vm48 = vcmask 392192
    %v50 = vsel %vm48, %v37, 0
    %52 = vmatpush.msra.mxu0 0.0
    %53 = vmatpush.msra.mxu0 0.0
    %54 = vmatpush.msra.mxu0 0.0
    %55 = vmatpush.msra.mxu0 0.0
    %56 = vmatpush.msra.mxu0 0.0
    %57 = vmatpush.msra.mxu0 0.0
    %58 = vmatpush.msra.mxu0 0.0
    %59 = vmatpush.msra.mxu0 0.0
    %60 = vmatpush.msra.mxu0 0.0
    %61 = vmatpush.msra.mxu0 0.0
    %62 = vmatpush.msra.mxu0 %v43
    %63 = vmatpush.msra.mxu0 %v42
    %64 = vmatpush.msra.mxu0 %v41
    %65 = vmatpush.msra.mxu0 %v40
    %66 = vmatpush.msra.mxu0 %v39
    %67 = vmatpush.msra.mxu0 %v38
    %68 = vmatmul.f32.gmra.mxu0 %v50
    %v69 = vpop.f32.mrf.mxu0
    %v70 = vadd.f32 %v46, %v69
    %71 = vdwg.mxu0
    %v72 = vxor.u32 %v70, 2147483648
    %v73 = vmul.f32 %v72, 1.442695
    %v74 = vpow.pop %v73
    %v75 = vadd.f32 %v74, 1.0
    %v76 = vrcp.pop %v75
    %v77 = vmul.f32 %v75, %v76
    %v78 = vsub.f32 1.0, %v77
    %v79 = vmul.f32 %v76, %v78
    %v80 = vadd.f32 %v76, %v79
    %vm81 = vweird.f32 %v75
    %vm82 = vweird.f32 %v76
    %vm83 = vmor %vm81, %vm82
    %v84 = vsel %vm83, %v76, %v80
    %v85 = vand.u32 2147483647, %v75
    %vm86 = vcmp.eq.f32.partialorder %v85, 8.507059e+37
    %v87 = vand.u32 %v75, 2147483648
    %v88 = vor.u32 1.1754944e-38, %v87
    %v89 = vsel %vm86, %v88, %v84
    %v90 = vmul.f32 1.0, %v89
    %v91 = vtanh.pop %v70
    %v92 = vld [vmem:[%s3] sm:$0x3]
    %94 = vrot.lane.b32.xlu0 %v92, 32
    %v95 = vpop.permute.xlu0 %94
    %v97 = vmul.f32 %v90, %v95
    %99 = vrot.lane.b32.xlu0 %v91, 64
    %v100 = vpop.permute.xlu0 %99
    %v102 = vmul.f32 %v90, %v100
    %104 = vrot.lane.b32.xlu0 %v102, 32
    %v105 = vpop.permute.xlu0 %104
    %v107 = vadd.f32 %v97, %v105
    %v108 = vtanh.pop %v107
    %110 = vrot.lane.b32.xlu0 %v108, 64
    %v111 = vpop.permute.xlu0 %110
    %v113 = vmul.f32 %v90, %v111
    %115 = vrot.lane.b32.xlu0 %v107, 96
    %v116 = vpop.permute.xlu0 %115
    %vm118 = vcmask 254976
    %119 = vst.msk [vmem:[#allocation6] sm:$0x3] %vm118, %v116
    %121 = vrot.lane.b32.xlu0 %v113, 32
    %v122 = vpop.permute.xlu0 %121
    %124 = vst.msk [vmem:[#allocation5] sm:$0x3] %vm118, %v122
    // Predicated region
    $region22: #{lstm_cell_forward.1} parent=1 // pred_check
      _
    $region23: #{lstm_cell_forward.1} parent=1 // pred_check_branch
      %126 = sbr.rel (0) target = $region25
    $region24: #{lstm_cell_forward.1} parent=1 // pred_region
      %128 = vsyncadd [#allocation4], 0
      %s130 = sshll.u32 [#allocation5], 4
      %s131 = int_to_ptr.vmem [resolvable:$true] %s130
      %s132 = sshll.u32 %s4, 4
      %s133 = int_to_ptr.hbm [resolvable:$true] %s132
      %135 = dma.vmem_to_hbm [thread:$0]  %s131, 32, %s133, [#allocation4]
    $region25: #{lstm_cell_forward.1} parent=1 // pred_fallthru
      _
    // Predicated region
    $region26: #{lstm_cell_forward.1} parent=1 // pred_check
      _
    $region27: #{lstm_cell_forward.1} parent=1 // pred_check_branch
      %137 = sbr.rel (0) target = $region29
    $region28: #{lstm_cell_forward.1} parent=1 // pred_region
      %139 = vsyncadd [#allocation7], 0
      %s141 = sshll.u32 [#allocation6], 4
      %s142 = int_to_ptr.vmem [resolvable:$true] %s141
      %s143 = sshll.u32 %s5, 4
      %s144 = int_to_ptr.hbm [resolvable:$true] %s143
      %146 = dma.vmem_to_hbm [thread:$0]  %s142, 32, %s144, [#allocation7]
    $region29: #{lstm_cell_forward.1} parent=1 // pred_fallthru
      _
    // Predicated region
    $region30: #{lstm_cell_forward.1} parent=1 // pred_check
      _
    $region31: #{lstm_cell_forward.1} parent=1 // pred_check_branch
      %148 = sbr.rel (0) target = $region33
    $region32: #{lstm_cell_forward.1} parent=1 // pred_region
      %150 = dma.done [#allocation4], 32
    $region33: #{lstm_cell_forward.1} parent=1 // pred_fallthru
      _
    // Predicated region
    $region34: #{lstm_cell_forward.1} parent=1 // pred_check
      _
    $region35: #{lstm_cell_forward.1} parent=1 // pred_check_branch
      %152 = sbr.rel (0) target = $region37
    $region36: #{lstm_cell_forward.1} parent=1 // pred_region
      %154 = dma.done [#allocation7], 32
    $region37: #{lstm_cell_forward.1} parent=1 // pred_fallthru
      _
    %155 = vsyncpa [#allocation3], 1
    %156 = vsyncpa [#allocation4], 1
    %157 = vsyncpa [#allocation7], 1

</llo_original>
